<compile_context>
chip_gen: v5e
topology: v5e:2x2
jax: 0.10.0
libtpu: 0.0.40
codegen_flags: <defaults>
</compile_context>

<pallas_src>
import functools

import jax
import jax.numpy as jnp
import numpy as np
from jax.experimental import pallas as pl
from jax.experimental.pallas import tpu as pltpu


# ----------------------------------------------------------------------------- kernel
def _ese_attn_kernel(w_ref, feat_ref, bn_b_ref, out_ref, *, cast_bf16):
    # w_ref:    (1, C, C)  folded  bn_scale * conv_w * gate_b   (feat dtype / bf16)
    # feat_ref: (1, C, T)  NCHW-native HW tile
    # bn_b_ref: (C, 1)     folded BN bias (f32)
    # out_ref:  (1, C, T)
    w = w_ref[0]
    x = feat_ref[0]
    if cast_bf16:
        x = x.astype(jnp.bfloat16)
    z = jnp.dot(w, x, preferred_element_type=jnp.float32)   # 1x1 conv (+gate +BN scale)
    z = z + bn_b_ref[...]                                    # folded BN bias (f32)
    out_ref[0] = (z * jax.nn.sigmoid(z)).astype(out_ref.dtype)   # swish


# ----------------------------------------------------------------------------- sizing
def _vmem_budget_bytes():
    """Generation-aware pipelined-footprint budget (~2/3 of physical VMEM)."""
    phys = 64 * 1024 * 1024            # conservative fallback (v7x physical)
    try:
        phys = int(pltpu.get_tpu_info().vmem_capacity_bytes)
    except Exception:
        pass
    return max(16 * 1024 * 1024, int(phys * 0.65))


def _pick_tile(hw, batch, c, feat_isz, w_isz, budget):
    """Largest HW tile whose pipelined footprint fits the budget.

    Per-grid-step footprint:
      2 * C*tile*isz   feat in  (double-buffered)
      2 * C*tile*isz   out      (double-buffered)
      2 * C*tile*4     f32 matmul result + swish temporary
      2 * C*C*w_isz    folded weight (double-buffered)  + slack
    """
    overhead = 2 * c * c * w_isz + 256 * 1024
    denom = c * (4 * feat_isz + 8)
    tile_max = max(128, (budget - overhead) // denom)

    if hw <= tile_max:
        if batch >= 2 or hw <= 128:
            return int(hw)             # full-HW block (exempt from 128-multiple rule)
        # batch == 1: split HW into >= 2 tiles so both v7x TensorCores get work
        half = pl.cdiv(pl.cdiv(hw, 2), 128) * 128
        return int(max(128, min(half, (tile_max // 128) * 128)))
    return int(max(128, (tile_max // 128) * 128))


# ----------------------------------------------------------------------------- wrapper
def ese_attn(feat_nchw, avg_nchw, fc_w, fc_b, conv_w,
             bn_gamma, bn_beta, bn_mean, bn_var, *, eps=1e-5):
    B, C, H, W = feat_nchw.shape
    HW = H * W
    dtype = feat_nchw.dtype
    f32 = jnp.float32

    # ---- gate: tiny per-batch fc + sigmoid, hoisted out of the kernel (f32) ----
    avg = avg_nchw.reshape(B, C).astype(f32)                       # (B, C)
    W_fc = fc_w.reshape(C, C).astype(f32)                          # (Cout, Cin)
    gate = jax.nn.sigmoid(avg @ W_fc.T + fc_b.astype(f32)[None, :])  # (B, C)

    # ---- folded eval-mode BN (f32) ---------------------------------------------
    inv_std = 1.0 / jnp.sqrt(bn_var.astype(f32) + eps)
    bn_s = bn_gamma.astype(f32) * inv_std                          # (C,)
    bn_b = (bn_beta.astype(f32) - bn_mean.astype(f32) * bn_s).reshape(C, 1)

    # ---- fold gate + BN scale into a per-batch conv weight (f32, then cast) ----
    Wc = conv_w.reshape(C, C).astype(f32)                          # (Cout, Cin)
    w_fold = (bn_s[:, None] * Wc)[None, :, :] * gate[:, None, :]   # (B, C, C)

    # bf16 MXU operands only when a big-C f32 matmul would stop being mem-bound.
    cast_bf16 = (dtype == jnp.float32) and (C >= 256)
    w_dtype = jnp.bfloat16 if cast_bf16 else dtype
    w_fold = w_fold.astype(w_dtype)

    # ---- NCHW-native flatten (free reshape); NO padding, NO post-slice ---------
    feat = feat_nchw.reshape(B, C, HW)

    budget = _vmem_budget_bytes()
    tile = _pick_tile(HW, B, C,
                      np.dtype(dtype).itemsize, np.dtype(w_dtype).itemsize, budget)
    grid = (B, pl.cdiv(HW, tile))      # ragged last tile handled by Pallas masking

    kernel = functools.partial(_ese_attn_kernel, cast_bf16=cast_bf16)
    out = pl.pallas_call(
        kernel,
        out_shape=jax.ShapeDtypeStruct((B, C, HW), dtype),
        grid_spec=pltpu.PrefetchScalarGridSpec(
            num_scalar_prefetch=0,
            grid=grid,
            in_specs=[
                pl.BlockSpec((1, C, C), lambda b, t: (b, 0, 0)),      # folded weight
                pl.BlockSpec((1, C, tile), lambda b, t: (b, 0, t)),   # feat tile
                pl.BlockSpec((C, 1), lambda b, t: (0, 0)),            # bn bias
            ],
            out_specs=pl.BlockSpec((1, C, tile), lambda b, t: (b, 0, t)),
        ),
        compiler_params=pltpu.CompilerParams(
            dimension_semantics=("parallel", "parallel"),
            vmem_limit_bytes=int(budget)),
    )(w_fold, feat, bn_b)

    return out.reshape(B, C, H, W)


# ----------------------------------------------------------------------------- reference
def ese_attn_reference(feat, avg, fc_w, fc_b, conv_w,
                       bn_gamma, bn_beta, bn_mean, bn_var, eps=1e-5):
    """Pure-JAX NCHW reference mirroring the PyTorch forward (eval-mode BN)."""
    B, C, H, W = feat.shape
    W_fc = fc_w.reshape(C, C)
    W_cv = conv_w.reshape(C, C)
    gate = jax.nn.sigmoid(
        jnp.einsum('oi,bihw->bohw', W_fc, avg) + fc_b[None, :, None, None])
    y = feat * gate
    z = jnp.einsum('oi,bihw->bohw', W_cv, y)
    inv_std = 1.0 / jnp.sqrt(bn_var + eps)
    z = (z - bn_mean[None, :, None, None]) * (bn_gamma * inv_std)[None, :, None, None] \
        + bn_beta[None, :, None, None]
    return z * jax.nn.sigmoid(z)


if __name__ == "__main__":
    def run_case(B, C, H, W, seed):
        key = jax.random.PRNGKey(seed)
        ks = jax.random.split(key, 8)
        feat = jax.random.normal(ks[0], (B, C, H, W), dtype=jnp.float32)
        # avg_feat is adaptive_avg_pool2d(feat, (1,1)) in the PPYOLOE head
        avg_feat = jnp.mean(feat, axis=(2, 3), keepdims=True)

        # Parameter shapes from __init__ (fc: Conv2d w/ bias, conv: bias=False + BN):
        fc_w = 0.001 * jax.random.normal(ks[1], (C, C, 1, 1), dtype=jnp.float32)
        fc_b = 0.05 * jax.random.normal(ks[2], (C,), dtype=jnp.float32)
        conv_w = 0.1 * jax.random.normal(ks[3], (C, C, 1, 1), dtype=jnp.float32)
        bn_gamma = 1.0 + 0.1 * jax.random.normal(ks[4], (C,), dtype=jnp.float32)
        bn_beta = 0.1 * jax.random.normal(ks[5], (C,), dtype=jnp.float32)
        bn_mean = 0.1 * jax.random.normal(ks[6], (C,), dtype=jnp.float32)
        bn_var = 0.5 + jax.random.uniform(ks[7], (C,), dtype=jnp.float32)

        out = ese_attn(feat, avg_feat, fc_w, fc_b, conv_w,
                       bn_gamma, bn_beta, bn_mean, bn_var)
        out = jax.block_until_ready(out)

        ref = ese_attn_reference(feat, avg_feat, fc_w, fc_b, conv_w,
                                 bn_gamma, bn_beta, bn_mean, bn_var)
        np.testing.assert_allclose(np.asarray(out), np.asarray(ref),
                                   rtol=1e-5, atol=1e-5)
        assert out.shape == (B, C, H, W)

    # 128-aligned HW, multi-batch: tile == full HW, grid = (B, 1)
    run_case(B=2, C=16, H=16, W=16, seed=0)
    # ragged HW (20x20=400), B == 1: HW split across >=2 tiles, partial last block
    run_case(B=1, C=16, H=20, W=20, seed=1)

    print("KERNEL_OK")
</pallas_src>

<mosaic_0001>
module attributes {stable_mosaic.version = 11 : i64} {
  func.func @_ese_attn_kernel(%arg0: i32, %arg1: i32, %arg2: memref<1x16x16xf32, #tpu.memory_space<vmem>>, %arg3: memref<1x16x256xf32, #tpu.memory_space<vmem>>, %arg4: memref<16x1xf32, #tpu.memory_space<vmem>>, %arg5: memref<1x16x256xf32, #tpu.memory_space<vmem>>) attributes {dimension_semantics = [#tpu.dimension_semantics<parallel>, #tpu.dimension_semantics<parallel>], iteration_bounds = array<i64: 2, 1>, scalar_prefetch = 0 : i64, scratch_operands = 0 : i64, tpu.core_type = #tpu.core_type<tc>, window_params = [{transform_indices = @transform_0, window_bounds = array<i64: 1, 16, 16>}, {transform_indices = @transform_1, window_bounds = array<i64: 1, 16, 256>}, {pipeline_mode = #tpu.pipeline_mode<synchronous>, transform_indices = @transform_2, window_bounds = array<i64: 16, 1>}, {transform_indices = @transform_3, window_bounds = array<i64: 1, 16, 256>}]} {
    %c0 = arith.constant 0 : index
    %c0_0 = arith.constant 0 : index
    %c0_1 = arith.constant 0 : index
    %0 = vector.load %arg2[%c0, %c0_0, %c0_1] : memref<1x16x16xf32, #tpu.memory_space<vmem>>, vector<1x16x16xf32>
    %1 = vector.shape_cast %0 : vector<1x16x16xf32> to vector<16x16xf32>
    %c0_2 = arith.constant 0 : index
    %c0_3 = arith.constant 0 : index
    %c0_4 = arith.constant 0 : index
    %2 = vector.load %arg3[%c0_2, %c0_3, %c0_4] : memref<1x16x256xf32, #tpu.memory_space<vmem>>, vector<1x16x256xf32>
    %3 = vector.shape_cast %2 : vector<1x16x256xf32> to vector<16x256xf32>
    %cst = arith.constant dense<0.000000e+00> : vector<16x256xf32>
    %4 = tpu.matmul %1, %3, %cst {dimension_numbers = #tpu.dot_dimension_numbers<[1], [0], [0], [1], [0, 0, 1, 1], [], []>} : vector<16x16xf32>, vector<16x256xf32>, vector<16x256xf32> -> vector<16x256xf32>
    %c0_5 = arith.constant 0 : index
    %c0_6 = arith.constant 0 : index
    %5 = vector.load %arg4[%c0_5, %c0_6] : memref<16x1xf32, #tpu.memory_space<vmem>>, vector<16x1xf32>
    %6 = vector.broadcast %5 : vector<16x1xf32> to vector<16x256xf32>
    %7 = arith.addf %4, %6 : vector<16x256xf32>
    %8 = arith.negf %7 : vector<16x256xf32>
    %9 = math.exp %8 : vector<16x256xf32>
    %cst_7 = arith.constant 1.000000e+00 : f32
    %10 = vector.broadcast %cst_7 : f32 to vector<16x256xf32>
    %11 = arith.addf %10, %9 : vector<16x256xf32>
    %12 = arith.divf %10, %11 : vector<16x256xf32>
    %13 = arith.mulf %7, %12 : vector<16x256xf32>
    %c0_8 = arith.constant 0 : index
    %c0_9 = arith.constant 0 : index
    %c0_10 = arith.constant 0 : index
    %14 = vector.load %arg5[%c0_8, %c0_9, %c0_10] : memref<1x16x256xf32, #tpu.memory_space<vmem>>, vector<1x16x256xf32>
    %15 = vector.shape_cast %14 : vector<1x16x256xf32> to vector<16x256xf32>
    %16 = vector.shape_cast %13 : vector<16x256xf32> to vector<1x16x256xf32>
    tpu.vector_store %arg5[%c0_8, %c0_9, %c0_10], %16 {strides = array<i32>} : memref<1x16x256xf32, #tpu.memory_space<vmem>>, vector<1x16x256xf32>,
    return
  }
  func.func @transform_0(%arg0: i32, %arg1: i32) -> (i32, i32, i32) {
    %c0_i32 = arith.constant 0 : i32
    %c0_i32_0 = arith.constant 0 : i32
    %c0_i32_1 = arith.constant 0 : i32
    return %arg0, %c0_i32, %c0_i32_0 : i32, i32, i32
  }
  func.func @transform_1(%arg0: i32, %arg1: i32) -> (i32, i32, i32) {
    %c0_i32 = arith.constant 0 : i32
    %c0_i32_0 = arith.constant 0 : i32
    return %arg0, %c0_i32, %arg1 : i32, i32, i32
  }
  func.func @transform_2(%arg0: i32, %arg1: i32) -> (i32, i32) {
    %c0_i32 = arith.constant 0 : i32
    %c0_i32_0 = arith.constant 0 : i32
    %c0_i32_1 = arith.constant 0 : i32
    return %c0_i32, %c0_i32_0 : i32, i32
  }
  func.func @transform_3(%arg0: i32, %arg1: i32) -> (i32, i32, i32) {
    %c0_i32 = arith.constant 0 : i32
    %c0_i32_0 = arith.constant 0 : i32
    return %arg0, %c0_i32, %arg1 : i32, i32, i32
  }
}

</mosaic_0001>

<llo_original>
// kernel: tpu_custom_call.1
$region0: #{tpu_custom_call.1}
  #allocation0 [shape = 'u32[]', space=smem, size = 0x4, offset = 0x4, fixed_abs, tag = 'smem constant byte address 0x4 - core index']
  #allocation1 [shape = 'u32[72,128]{1,0:T(1,128)}', space=vmem, size = 0x9000, scoped, tag = 'internal scratch']
  %s0 = inlined_call_operand.hbm [shape: f32[2,16,16], index: 0, kind: input, shape index: {}]
  %s1 = inlined_call_operand.hbm [shape: f32[2,16,256], index: 1, kind: input, shape index: {}]
  %s2 = inlined_call_operand.vmem [shape: f32[16,1], index: 2, kind: input, shape index: {}]
  %s3 = inlined_call_operand.hbm [shape: f32[2,16,256], index: 3, kind: output, shape index: {}]
  %s4 = sld [smem:[#allocation0]]
  $region53: #{tpu_custom_call.1} parent=0
    _
  %s6 = ssub.s32 1, %s4
  %s7 = scalar_select 0, %s6, %s4
  $region1: #{tpu_custom_call.1} parent=0
    #allocation2 [shape = 'u8[16384]{0}', space=vmem, size = 0x4000, scoped, tag = 'input window, operand 0']
    #allocation3 [shape = 's32[2]{0}', space=sflag, size = 0x8, scoped, tag = 'scoped memory for tpu_custom_call.1']
    #allocation4 [shape = 's32[2]{0}', space=sflag, size = 0x8, scoped, tag = 'scoped memory for tpu_custom_call.1']
    #allocation5 [shape = 'u8[32768]{0}', space=vmem, size = 0x8000, scoped, tag = 'input window, operand 1']
    #allocation6 [shape = 's32[2]{0}', space=sflag, size = 0x8, scoped, tag = 'scoped memory for tpu_custom_call.1']
    #allocation7 [shape = 'u8[32768]{0}', space=vmem, size = 0x8000, scoped, tag = 'output window, operand 0']
    %8 = vsyncpa [#allocation3], 0
    %s9 = scalar_lea.sflag [#allocation3], 1
    %10 = vsyncpa %s9, 0
    %11 = vsyncpa [#allocation6], 0
    %s12 = scalar_lea.sflag [#allocation6], 1
    %13 = vsyncpa %s12, 0
    %14 = vsyncpa [#allocation4], 0
    %s15 = scalar_lea.sflag [#allocation4], 1
    %16 = vsyncpa %s15, 0
    loop: start=0, step=1, limit=4
    $region2: #{tpu_custom_call.1} parent=1 // loop_pre_header
      _
    $region3: #{tpu_custom_call.1} parent=1 // loop_header
      %s18 = sphi 0, %s22
      %p19 = scmp.ge.s32.totalorder %s18, 4
      %s25 = sphi 0, %s37
      %s26 = sphi 0, %s33
      %s27 = sphi 0, %s25
      %s28 = sphi 0, %s26
      %s29 = sphi 0, %s27
      %s30 = sphi 0, %s28
      %s40 = sphi 0, %s42
      %s43 = sphi 0, %s40
      %s44 = sphi 0, %s43
      %s60 = sphi 0, %s44
      %s68 = sphi 0, %s70
      %s71 = sphi 0, %s68
      %s72 = sphi 0, %s71
      %s88 = sphi 0, %s72
      %s92 = sphi 0, %s92
      %s94 = sphi 0, %s92
      %s95 = sphi 0, %s94
      %s109 = sphi 0, %s95
      %s117 = sphi 0, %s119
      %s120 = sphi 0, %s117
      %s121 = sphi 0, %s120
      %s137 = sphi 0, %s121
    $region4: #{tpu_custom_call.1} parent=1 // loop_header_branch
      %21 = sbr.rel (%p19) target = $region8
    $region5: #{tpu_custom_call.1} parent=1 // loop_body
      %s23 = ssub.s32 %s18, 1
      %s24 = ssub.s32 %s18, 2
      %s31 = sadd.s32 1, %s26
      %p32 = scmp.ge.s32.totalorder %s31, 1
      %s33 = scalar_select %p32, 0, %s31
      %s34 = sadd.s32 1, %s25
      %s35 = scalar_select %p32, %s34, %s25
      %p36 = scmp.ge.s32.totalorder %s35, 2
      %s37 = scalar_select %p36, 0, %s35
      %s38 = ssub.s32 %s25, %s37
      %p39 = scmp.eq.s32.totalorder %s38, 0
      %s41 = sadd.s32 %s40, 1
      %s42 = scalar_select %p39, %s40, %s41
      %p45 = pneg %p39
      %p46 = scmp.eq.s32.totalorder %s18, 1
      %p47 = por %p45, %p46
      %p48 = scmp.ne.s32.totalorder %s40, %s43
      %p49 = scmp.eq.s32.totalorder %s18, 0
      %p50 = por %p48, %p49
      %p51 = scmp.ne.s32.totalorder %s40, %s43
      %p52 = scmp.eq.s32.totalorder %s23, 1
      %p53 = por %p51, %p52
      %p54 = scmp.ne.s32.totalorder %s43, %s44
      %p55 = scmp.eq.s32.totalorder %s23, 0
      %p56 = por %p54, %p55
      %p57 = scmp.ne.s32.totalorder %s43, %s44
      %p58 = scmp.eq.s32.totalorder %s24, 1
      %p59 = por %p57, %p58
      %p61 = scmp.ne.s32.totalorder %s44, %s60
      %p62 = scmp.eq.s32.totalorder %s24, 0
      %p63 = por %p61, %p62
      %s64 = ssub.s32 %s25, %s37
      %s65 = ssub.s32 %s26, %s33
      %s66 = sor.u32 %s64, %s65
      %p67 = scmp.eq.s32.totalorder %s66, 0
      %s69 = sadd.s32 %s68, 1
      %s70 = scalar_select %p67, %s68, %s69
      %p73 = pneg %p67
      %p74 = scmp.eq.s32.totalorder %s18, 1
      %p75 = por %p73, %p74
      %p76 = scmp.ne.s32.totalorder %s68, %s71
      %p77 = scmp.eq.s32.totalorder %s18, 0
      %p78 = por %p76, %p77
      %p79 = scmp.ne.s32.totalorder %s68, %s71
      %p80 = scmp.eq.s32.totalorder %s23, 1
      %p81 = por %p79, %p80
      %p82 = scmp.ne.s32.totalorder %s71, %s72
      %p83 = scmp.eq.s32.totalorder %s23, 0
      %p84 = por %p82, %p83
      %p85 = scmp.ne.s32.totalorder %s71, %s72
      %p86 = scmp.eq.s32.totalorder %s24, 1
      %p87 = por %p85, %p86
      %p89 = scmp.ne.s32.totalorder %s72, %s88
      %p90 = scmp.eq.s32.totalorder %s24, 0
      %p91 = por %p89, %p90
      %s93 = sadd.s32 %s92, 1
      %p96 = scmp.eq.s32.totalorder %s18, 1
      %p97 = scmp.ne.s32.totalorder %s92, %s94
      %p98 = scmp.eq.s32.totalorder %s18, 0
      %p99 = por %p97, %p98
      %p100 = scmp.ne.s32.totalorder %s92, %s94
      %p101 = scmp.eq.s32.totalorder %s23, 1
      %p102 = por %p100, %p101
      %p103 = scmp.ne.s32.totalorder %s94, %s95
      %p104 = scmp.eq.s32.totalorder %s23, 0
      %p105 = por %p103, %p104
      %p106 = scmp.ne.s32.totalorder %s94, %s95
      %p107 = scmp.eq.s32.totalorder %s24, 1
      %p108 = por %p106, %p107
      %p110 = scmp.ne.s32.totalorder %s95, %s109
      %p111 = scmp.eq.s32.totalorder %s24, 0
      %p112 = por %p110, %p111
      %s113 = ssub.s32 %s25, %s37
      %s114 = ssub.s32 %s26, %s33
      %s115 = sor.u32 %s113, %s114
      %p116 = scmp.eq.s32.totalorder %s115, 0
      %s118 = sadd.s32 %s117, 1
      %s119 = scalar_select %p116, %s117, %s118
      %p122 = pneg %p116
      %p123 = scmp.eq.s32.totalorder %s18, 1
      %p124 = por %p122, %p123
      %p125 = scmp.ne.s32.totalorder %s117, %s120
      %p126 = scmp.eq.s32.totalorder %s18, 0
      %p127 = por %p125, %p126
      %p128 = scmp.ne.s32.totalorder %s117, %s120
      %p129 = scmp.eq.s32.totalorder %s23, 1
      %p130 = por %p128, %p129
      %p131 = scmp.ne.s32.totalorder %s120, %s121
      %p132 = scmp.eq.s32.totalorder %s23, 0
      %p133 = por %p131, %p132
      %p134 = scmp.ne.s32.totalorder %s120, %s121
      %p135 = scmp.eq.s32.totalorder %s24, 1
      %p136 = por %p134, %p135
      %p138 = scmp.ne.s32.totalorder %s121, %s137
      %p139 = scmp.eq.s32.totalorder %s24, 0
      %p140 = por %p138, %p139
      %p141 = scmp.le.s32.totalorder 1, %s18
      %p142 = scmp.lt.s32.totalorder %s18, 3
      %p143 = pnand %p141, %p142
      %p144 = pneg %p143
      // Predicated region
      $region9: #{tpu_custom_call.1} parent=5 // pred_check
        _
      $region10: #{tpu_custom_call.1} parent=5 // pred_check_branch
        %146 = sbr.rel (%p143) target = $region12
      $region11: #{tpu_custom_call.1} parent=5 // pred_region
        %s147 = ssub.s32 %s18, 1
        // Predicated region
        $region13: #{tpu_custom_call.1} parent=11 // pred_check
          %p148 = pneg %p105
        $region14: #{tpu_custom_call.1} parent=11 // pred_check_branch
          %150 = sbr.rel (%p148) target = $region16
        $region15: #{tpu_custom_call.1} parent=11 // pred_region
          _
        $region16: #{tpu_custom_call.1} parent=11 // pred_fallthru
          _
      $region12: #{tpu_custom_call.1} parent=5 // pred_fallthru
        _
      %p151 = scmp.lt.s32.totalorder %s18, 2
      // Predicated region
      $region17: #{tpu_custom_call.1} parent=5 // pred_check
        %p152 = pneg %p151
      $region18: #{tpu_custom_call.1} parent=5 // pred_check_branch
        %154 = sbr.rel (%p152) target = $region20
      $region19: #{tpu_custom_call.1} parent=5 // pred_region
        // Predicated region
        $region21: #{tpu_custom_call.1} parent=19 // pred_check
          %p155 = pneg %p50
        $region22: #{tpu_custom_call.1} parent=19 // pred_check_branch
          %157 = sbr.rel (%p155) target = $region24
        $region23: #{tpu_custom_call.1} parent=19 // pred_region
          %s158 = sand.u32 %s40, 1
          %s159 = scalar_lea.sflag [#allocation3], %s158
          %s160 = sand.u32 %s40, 1
          %s161 = smul.addr %s160, 16
          %s162 = scalar_lea.vmem [#allocation2], %s161
          %164 = vsyncadd %s159, 0
          %s165 = smul.addr %s25, 2
          %s166 = smul.addr %s165, 8
          %s167 = scalar_lea.hbm %s0, %s166
          %s168 = sshll.u32 %s167, 4
          %s169 = int_to_ptr.hbm [resolvable:$true] %s168
          %s170 = sshll.u32 %s162, 4
          %s171 = int_to_ptr.vmem [resolvable:$true] %s170
          %176 = dma.hbm_to_vmem [thread:$0]  %s169, 256, %s171, %s159, 128, 128, 8
        $region24: #{tpu_custom_call.1} parent=19 // pred_fallthru
          _
        // Predicated region
        $region25: #{tpu_custom_call.1} parent=19 // pred_check
          %p177 = pneg %p78
        $region26: #{tpu_custom_call.1} parent=19 // pred_check_branch
          %179 = sbr.rel (%p177) target = $region28
        $region27: #{tpu_custom_call.1} parent=19 // pred_region
          %s180 = sand.u32 %s68, 1
          %s181 = scalar_lea.sflag [#allocation6], %s180
          %s182 = sand.u32 %s68, 1
          %s183 = smul.addr %s182, 32
          %s184 = scalar_lea.vmem [#allocation5], %s183
          %s185 = smul.u32 2, %s26
          %187 = vsyncadd %s181, 0
          %s188 = smul.addr %s25, 4
          %s189 = sadd.s32 %s185, %s188
          %s190 = smul.addr %s189, 8
          %s191 = scalar_lea.hbm %s1, %s190
          %s192 = sshll.u32 %s191, 4
          %s193 = int_to_ptr.hbm [resolvable:$true] %s192
          %s194 = sshll.u32 %s184, 4
          %s195 = int_to_ptr.vmem [resolvable:$true] %s194
          %200 = dma.hbm_to_vmem [thread:$0]  %s193, 512, %s195, %s181, 256, 256, 16
        $region28: #{tpu_custom_call.1} parent=19 // pred_fallthru
          _
      $region20: #{tpu_custom_call.1} parent=5 // pred_fallthru
        _
      %p201 = scmp.le.s32.totalorder 1, %s18
      %p202 = scmp.lt.s32.totalorder %s18, 3
      %p203 = pnand %p201, %p202
      %p204 = pneg %p203
      // Predicated region
      $region29: #{tpu_custom_call.1} parent=5 // pred_check
        _
      $region30: #{tpu_custom_call.1} parent=5 // pred_check_branch
        %206 = sbr.rel (%p203) target = $region32
      $region31: #{tpu_custom_call.1} parent=5 // pred_region
        %s207 = ssub.s32 %s18, 1
        %s208 = sand.u32 %s43, 1
        %s209 = scalar_lea.sflag [#allocation3], %s208
        %s210 = sand.u32 %s43, 1
        %s211 = smul.addr %s210, 16
        %s212 = scalar_lea.vmem [#allocation2], %s211
        // Predicated region
        $region33: #{tpu_custom_call.1} parent=31 // pred_check
          %p213 = pneg %p56
        $region34: #{tpu_custom_call.1} parent=31 // pred_check_branch
          %215 = sbr.rel (%p213) target = $region36
        $region35: #{tpu_custom_call.1} parent=31 // pred_region
          %217 = dma.done %s209, 256
        $region36: #{tpu_custom_call.1} parent=31 // pred_fallthru
          _
        %s218 = sand.u32 %s71, 1
        %s219 = scalar_lea.sflag [#allocation6], %s218
        %s220 = sand.u32 %s71, 1
        %s221 = smul.addr %s220, 32
        %s222 = scalar_lea.vmem [#allocation5], %s221
        // Predicated region
        $region37: #{tpu_custom_call.1} parent=31 // pred_check
          %p223 = pneg %p84
        $region38: #{tpu_custom_call.1} parent=31 // pred_check_branch
          %225 = sbr.rel (%p223) target = $region40
        $region39: #{tpu_custom_call.1} parent=31 // pred_region
          %227 = dma.done %s219, 512
        $region40: #{tpu_custom_call.1} parent=31 // pred_fallthru
          _
        %s228 = sand.u32 %s43, 1
        %s229 = scalar_lea.sflag [#allocation3], %s228
        %s230 = sand.u32 %s43, 1
        %s231 = smul.addr %s230, 16
        %s232 = scalar_lea.vmem [#allocation2], %s231
        %p233 = pneg %p56
        %p234 = pneg %p53
        %s235 = sand.u32 %s71, 1
        %s236 = scalar_lea.sflag [#allocation6], %s235
        %s237 = sand.u32 %s71, 1
        %s238 = smul.addr %s237, 32
        %s239 = scalar_lea.vmem [#allocation5], %s238
        %p240 = pneg %p84
        %p241 = pneg %p81
        %p242 = pneg %p105
        %p243 = pneg %p102
        %p244 = pneg %p133
        %p245 = pneg %p130
        %s246 = sand.u32 %s120, 1
        %s247 = scalar_lea.sflag [#allocation4], %s246
        %s248 = sand.u32 %s120, 1
        %s249 = smul.addr %s248, 32
        %s250 = scalar_lea.vmem [#allocation7], %s249
        %s251 = smul.u32 2, %s28
        %s252 = smul.u32 2, %s28
        %v253 = vld [vmem:[%s212] sm:$0xff]
        %v254 = vld [vmem:[%s212 + $0x8] sm:$0xff]
        %v255 = vld [vmem:[%s222] sm:$0xff]
        %v256 = vld [vmem:[%s222 + $0x8] sm:$0xff]
        %v257 = vld [vmem:[%s222 + $0x10] sm:$0xff]
        %v258 = vld [vmem:[%s222 + $0x18] sm:$0xff]
        %v259 = vld [vmem:[%s2] sm:$0xff]
        %v260 = vld [vmem:[%s2 + $0x8] sm:$0xff]
        %262 = vset.pattern.permute.xlu0 0
        %263 = vperm.xlu0 %262, %v259
        %v264 = vpop.permute.xlu0 %263
        %267 = vset.pattern.permute.xlu0 0
        %268 = vperm.xlu0 %267, %v260
        %v269 = vpop.permute.xlu0 %268
        %vm271 = vcmask 130048
        %v273 = vsel %vm271, %v253, 0
        %v276 = vsel %vm271, %v254, 0
        %278 = vmatpush.msra.mxu0 0.0
        %279 = vmatpush.msra.mxu0 0.0
        %280 = vmatpush.msra.mxu0 0.0
        %281 = vmatpush.msra.mxu0 0.0
        %282 = vmatpush.msra.mxu0 0.0
        %283 = vmatpush.msra.mxu0 0.0
        %284 = vmatpush.msra.mxu0 0.0
        %285 = vmatpush.msra.mxu0 0.0
        %286 = vmatpush.msra.mxu0 0.0
        %287 = vmatpush.msra.mxu0 0.0
        %288 = vmatpush.msra.mxu0 0.0
        %289 = vmatpush.msra.mxu0 0.0
        %290 = vmatpush.msra.mxu0 0.0
        %291 = vmatpush.msra.mxu0 0.0
        %292 = vmatpush.msra.mxu0 %v257
        %293 = vmatpush.msra.mxu0 %v255
        %294 = vmatmul.f32.gmra.mxu0 %v273
        %v295 = vpop.f32.mrf.mxu0
        %v296 = vadd.f32 %v264, %v295
        %297 = vmatmul.f32.gmra.mxu0 %v276
        %v298 = vpop.f32.mrf.mxu0
        %v299 = vadd.f32 %v269, %v298
        %300 = vdwg.mxu0
        %301 = vmatpush.msra.mxu0 0.0
        %302 = vmatpush.msra.mxu0 0.0
        %303 = vmatpush.msra.mxu0 0.0
        %304 = vmatpush.msra.mxu0 0.0
        %305 = vmatpush.msra.mxu0 0.0
        %306 = vmatpush.msra.mxu0 0.0
        %307 = vmatpush.msra.mxu0 0.0
        %308 = vmatpush.msra.mxu0 0.0
        %309 = vmatpush.msra.mxu0 0.0
        %310 = vmatpush.msra.mxu0 0.0
        %311 = vmatpush.msra.mxu0 0.0
        %312 = vmatpush.msra.mxu0 0.0
        %313 = vmatpush.msra.mxu0 0.0
        %314 = vmatpush.msra.mxu0 0.0
        %315 = vmatpush.msra.mxu0 %v258
        %316 = vmatpush.msra.mxu0 %v256
        %317 = vmatmul.f32.gmra.mxu0 %v273
        %v318 = vpop.f32.mrf.mxu0
        %v319 = vadd.f32 %v264, %v318
        %320 = vmatmul.f32.gmra.mxu0 %v276
        %v321 = vpop.f32.mrf.mxu0
        %v322 = vadd.f32 %v269, %v321
        %323 = vdwg.mxu0
        %v324 = vxor.u32 %v296, 2147483648
        %v325 = vxor.u32 %v319, 2147483648
        %v326 = vxor.u32 %v299, 2147483648
        %v327 = vxor.u32 %v322, 2147483648
        %v328 = vmul.f32 %v324, 1.442695
        %v329 = vpow.pop %v328
        %v330 = vmul.f32 %v325, 1.442695
        %v331 = vpow.pop %v330
        %v332 = vmul.f32 %v326, 1.442695
        %v333 = vpow.pop %v332
        %v334 = vmul.f32 %v327, 1.442695
        %v335 = vpow.pop %v334
        %v336 = vadd.f32 %v329, 1.0
        %v337 = vadd.f32 %v331, 1.0
        %v338 = vadd.f32 %v333, 1.0
        %v339 = vadd.f32 %v335, 1.0
        %v340 = vrcp.pop %v336
        %v341 = vmul.f32 %v336, %v340
        %v342 = vsub.f32 1.0, %v341
        %v343 = vmul.f32 %v340, %v342
        %v344 = vadd.f32 %v340, %v343
        %vm345 = vweird.f32 %v336
        %vm346 = vweird.f32 %v340
        %vm347 = vmor %vm345, %vm346
        %v348 = vsel %vm347, %v340, %v344
        %v349 = vand.u32 2147483647, %v336
        %vm350 = vcmp.eq.f32.partialorder %v349, 8.507059e+37
        %v351 = vand.u32 %v336, 2147483648
        %v352 = vor.u32 1.1754944e-38, %v351
        %v353 = vsel %vm350, %v352, %v348
        %v354 = vmul.f32 1.0, %v353
        %v355 = vrcp.pop %v337
        %v356 = vmul.f32 %v337, %v355
        %v357 = vsub.f32 1.0, %v356
        %v358 = vmul.f32 %v355, %v357
        %v359 = vadd.f32 %v355, %v358
        %vm360 = vweird.f32 %v337
        %vm361 = vweird.f32 %v355
        %vm362 = vmor %vm360, %vm361
        %v363 = vsel %vm362, %v355, %v359
        %v364 = vand.u32 2147483647, %v337
        %vm365 = vcmp.eq.f32.partialorder %v364, 8.507059e+37
        %v366 = vand.u32 %v337, 2147483648
        %v367 = vor.u32 1.1754944e-38, %v366
        %v368 = vsel %vm365, %v367, %v363
        %v369 = vmul.f32 1.0, %v368
        %v370 = vrcp.pop %v338
        %v371 = vmul.f32 %v338, %v370
        %v372 = vsub.f32 1.0, %v371
        %v373 = vmul.f32 %v370, %v372
        %v374 = vadd.f32 %v370, %v373
        %vm375 = vweird.f32 %v338
        %vm376 = vweird.f32 %v370
        %vm377 = vmor %vm375, %vm376
        %v378 = vsel %vm377, %v370, %v374
        %v379 = vand.u32 2147483647, %v338
        %vm380 = vcmp.eq.f32.partialorder %v379, 8.507059e+37
        %v381 = vand.u32 %v338, 2147483648
        %v382 = vor.u32 1.1754944e-38, %v381
        %v383 = vsel %vm380, %v382, %v378
        %v384 = vmul.f32 1.0, %v383
        %v385 = vrcp.pop %v339
        %v386 = vmul.f32 %v339, %v385
        %v387 = vsub.f32 1.0, %v386
        %v388 = vmul.f32 %v385, %v387
        %v389 = vadd.f32 %v385, %v388
        %vm390 = vweird.f32 %v339
        %vm391 = vweird.f32 %v385
        %vm392 = vmor %vm390, %vm391
        %v393 = vsel %vm392, %v385, %v389
        %v394 = vand.u32 2147483647, %v339
        %vm395 = vcmp.eq.f32.partialorder %v394, 8.507059e+37
        %v396 = vand.u32 %v339, 2147483648
        %v397 = vor.u32 1.1754944e-38, %v396
        %v398 = vsel %vm395, %v397, %v393
        %v399 = vmul.f32 1.0, %v398
        %v400 = vmul.f32 %v296, %v354
        %v401 = vmul.f32 %v319, %v369
        %v402 = vmul.f32 %v299, %v384
        %v403 = vmul.f32 %v322, %v399
        %404 = vst [vmem:[%s250] sm:$0xff] %v400
        %405 = vst [vmem:[%s250 + $0x8] sm:$0xff] %v401
        %406 = vst [vmem:[%s250 + $0x10] sm:$0xff] %v402
        %407 = vst [vmem:[%s250 + $0x18] sm:$0xff] %v403
        %s408 = sand.u32 %s120, 1
        %s409 = scalar_lea.sflag [#allocation4], %s408
        %s410 = sand.u32 %s120, 1
        %s411 = smul.addr %s410, 32
        %s412 = scalar_lea.vmem [#allocation7], %s411
        // Predicated region
        $region41: #{tpu_custom_call.1} parent=31 // pred_check
          %p413 = pneg %p130
        $region42: #{tpu_custom_call.1} parent=31 // pred_check_branch
          %415 = sbr.rel (%p413) target = $region44
        $region43: #{tpu_custom_call.1} parent=31 // pred_region
          %s416 = smul.u32 2, %s28
          %418 = vsyncadd %s409, 0
          %s419 = smul.addr %s27, 4
          %s420 = sadd.s32 %s416, %s419
          %s421 = smul.addr %s420, 8
          %s422 = scalar_lea.hbm %s3, %s421
          %s423 = sshll.u32 %s412, 4
          %s424 = int_to_ptr.vmem [resolvable:$true] %s423
          %s425 = sshll.u32 %s422, 4
          %s426 = int_to_ptr.hbm [resolvable:$true] %s425
          %431 = dma.vmem_to_hbm [thread:$0]  %s424, 512, %s426, %s409, 256, 256, 16
        $region44: #{tpu_custom_call.1} parent=31 // pred_fallthru
          _
      $region32: #{tpu_custom_call.1} parent=5 // pred_fallthru
        _
      %p432 = scmp.le.s32.totalorder 2, %s18
      // Predicated region
      $region45: #{tpu_custom_call.1} parent=5 // pred_check
        %p433 = pneg %p432
      $region46: #{tpu_custom_call.1} parent=5 // pred_check_branch
        %435 = sbr.rel (%p433) target = $region48
      $region47: #{tpu_custom_call.1} parent=5 // pred_region
        %s436 = ssub.s32 %s18, 2
        // Predicated region
        $region49: #{tpu_custom_call.1} parent=47 // pred_check
          %p437 = pneg %p136
        $region50: #{tpu_custom_call.1} parent=47 // pred_check_branch
          %439 = sbr.rel (%p437) target = $region52
        $region51: #{tpu_custom_call.1} parent=47 // pred_region
          %s440 = sand.u32 %s121, 1
          %s441 = scalar_lea.sflag [#allocation4], %s440
          %s442 = sand.u32 %s121, 1
          %s443 = smul.addr %s442, 32
          %s444 = scalar_lea.vmem [#allocation7], %s443
          %446 = dma.done %s441, 512
        $region52: #{tpu_custom_call.1} parent=47 // pred_fallthru
          _
      $region48: #{tpu_custom_call.1} parent=5 // pred_fallthru
        _
    $region6: #{tpu_custom_call.1} parent=1 // loop_footer
      %s22 = sadd.s32 1, %s18
    $region7: #{tpu_custom_call.1} parent=1 // loop_footer_branch
      %17 = sbr.rel target = $region3
    $region8: #{tpu_custom_call.1} parent=1 // loop_exit
      _
    %447 = vsyncpa [#allocation3], 1
    %s448 = scalar_lea.sflag [#allocation3], 1
    %449 = vsyncpa %s448, 1
    %450 = vsyncpa [#allocation6], 1
    %s451 = scalar_lea.sflag [#allocation6], 1
    %452 = vsyncpa %s451, 1
    %453 = vsyncpa [#allocation4], 1
    %s454 = scalar_lea.sflag [#allocation4], 1
    %455 = vsyncpa %s454, 1

</llo_original>
